<compile_context>
chip_gen: v5e
topology: v5e:2x2
jax: 0.10.0
libtpu: 0.0.40
codegen_flags: <defaults>
</compile_context>

<pallas_src>
import jax
import jax.numpy as jnp
from jax.experimental import pallas as pl
from jax.experimental.pallas import tpu as pltpu


DIM_IN = 6 * (9 - 2) + 1  # 43: brick layout [7x6] flattened + ball count [1]
H1, H2, H_OUT = 24, 12, 1


def _evaluator_kernel(xT_ref, w1_ref, b1_ref, w2_ref, b2_ref, w3_ref, b3_ref, o_ref):
    xT = xT_ref[...]                                                     # [43, TB], batch on lanes

    # Layer 1: Linear(43 -> 24) + (dropout == identity in eval) + ReLU   (MXU, lane-dense N=TB)
    h1 = jnp.dot(w1_ref[...], xT, preferred_element_type=jnp.float32)   # [24, TB]
    h1 = jnp.maximum(h1 + b1_ref[...], 0.0)

    # Layer 2: Linear(24 -> 12) + (dropout == identity in eval) + ReLU   (MXU)
    h2 = jnp.dot(w2_ref[...], h1, preferred_element_type=jnp.float32)   # [12, TB]
    h2 = jnp.maximum(h2 + b2_ref[...], 0.0)

    # Layer 3: Linear(12 -> 1) + ReLU. N=1 MXU matmul would use <1% of the array and sit
    # on the critical path, so do it as VPU multiply + sublane reduce (XLU) instead.
    h3 = jnp.sum(h2 * w3_ref[...], axis=0, keepdims=True)               # [1, TB]
    o_ref[...] = jnp.maximum(h3 + b3_ref[...], 0.0)


def _round_up(n, m):
    return ((n + m - 1) // m) * m


def evaluator_forward(x, params, *, block_b=1024):
    """x: [B, 43] float32. params: PyTorch-layout dict (w: [out, in], b: [out]). Returns [B, 1]."""
    w1, b1 = params["w1"], params["b1"]
    w2, b2 = params["w2"], params["b2"]
    w3, b3 = params["w3"], params["b3"]
    B, F = x.shape

    # Batch sits on the lane axis -> tile must be a multiple of 128; pad B up to the tile.
    tb = _round_up(min(block_b, _round_up(max(B, 1), 128)), 128)
    b_pad = _round_up(B, tb)
    if b_pad != B:
        x = jnp.pad(x, ((0, b_pad - B), (0, 0)))
    x_t = x.T  # [F, b_pad] — wrapper-side layout plumbing so the kernel is lane-dense.

    # Kernel-friendly parameter shapes (still tiny; constant-folded under jit).
    b1c = b1.reshape(H1, 1)
    b2c = b2.reshape(H2, 1)
    b3c = b3.reshape(H_OUT, 1)
    w3c = w3.T  # [12, 1] — broadcasts across the TB lanes inside the kernel.

    grid = (b_pad // tb,)
    resident = lambda shape: pl.BlockSpec(shape, lambda i: (0, 0))  # stays in VMEM across tiles

    flops = 2 * b_pad * (F * H1 + H1 * H2 + H2 * H_OUT)
    bytes_accessed = 4 * (b_pad * F + b_pad * H_OUT
                          + H1 * F + H1 + H2 * H1 + H2 + H_OUT * H2 + H_OUT)

    out_t = pl.pallas_call(
        _evaluator_kernel,
        out_shape=jax.ShapeDtypeStruct((H_OUT, b_pad), jnp.float32),
        grid_spec=pl.GridSpec(
            grid=grid,
            in_specs=[
                pl.BlockSpec((F, tb), lambda i: (0, i)),     # stream x tiles (auto-pipelined)
                resident(w1.shape), resident(b1c.shape),
                resident(w2.shape), resident(b2c.shape),
                resident(w3c.shape), resident(b3c.shape),
            ],
            out_specs=pl.BlockSpec((H_OUT, tb), lambda i: (0, i)),  # lane-dense [1, TB] output
        ),
        compiler_params=pltpu.CompilerParams(
            dimension_semantics=("parallel",),          # shard batch tiles across TCs (v7x megacore)
            vmem_limit_bytes=32 * 1024 * 1024,          # explicit budget; fits v7x's 64 MiB VMEM
        ),
        cost_estimate=pl.CostEstimate(
            flops=flops, transcendentals=0, bytes_accessed=bytes_accessed),
    )(x_t, w1, b1c, w2, b2c, w3c, b3c)

    return out_t.T[:B]  # [B, 1]


def init_params(key):
    """Deterministic init matching nn.Linear defaults; PyTorch layout (w: [out, in], b: [out])."""
    ks = jax.random.split(key, 6)

    def lin(kw, kb, fan_in, fan_out):
        bound = 1.0 / jnp.sqrt(float(fan_in))
        w = jax.random.uniform(kw, (fan_out, fan_in), jnp.float32, -bound, bound)
        b = jax.random.uniform(kb, (fan_out,), jnp.float32, -bound, bound)
        return w, b

    w1, b1 = lin(ks[0], ks[1], DIM_IN, H1)
    w2, b2 = lin(ks[2], ks[3], H1, H2)
    w3, b3 = lin(ks[4], ks[5], H2, H_OUT)
    return {"w1": w1, "b1": b1, "w2": w2, "b2": b2, "w3": w3, "b3": b3}


def evaluator_ref(x, p):
    """Pure-JAX reference (PyTorch layout) for correctness check."""
    h = jnp.maximum(x @ p["w1"].T + p["b1"], 0.0)
    h = jnp.maximum(h @ p["w2"].T + p["b2"], 0.0)
    return jnp.maximum(h @ p["w3"].T + p["b3"], 0.0)


if __name__ == "__main__":
    key = jax.random.PRNGKey(0)
    k_params, k_x = jax.random.split(key)

    params = init_params(k_params)

    # Small deterministic example consistent with the module: [B, 43].
    B = 8
    bricks = jax.random.bernoulli(k_x, 0.5, (B, DIM_IN - 1)).astype(jnp.float32)
    balls = jnp.arange(1, B + 1, dtype=jnp.float32).reshape(B, 1)
    x = jnp.concatenate([bricks, balls], axis=1)

    fwd = jax.jit(evaluator_forward)
    out = jax.block_until_ready(fwd(x, params))

    ref = evaluator_ref(x, params)
    assert out.shape == (B, 1), out.shape
    assert jnp.allclose(out, ref, atol=1e-5, rtol=1e-5), (out, ref)
    assert bool(jnp.all(out >= 0.0))  # final ReLU => non-negative

    # Multi-tile (grid > 1) correctness check with a small tile size.
    B2 = 300
    x2 = jax.random.uniform(jax.random.PRNGKey(1), (B2, DIM_IN), jnp.float32)
    out2 = jax.block_until_ready(evaluator_forward(x2, params, block_b=128))
    assert out2.shape == (B2, 1)
    assert jnp.allclose(out2, evaluator_ref(x2, params), atol=1e-5, rtol=1e-5)

    print("KERNEL_OK")
</pallas_src>

<mosaic_0001>
module attributes {stable_mosaic.version = 11 : i64} {
  func.func @_evaluator_kernel(%arg0: i32, %arg1: memref<43x128xf32, #tpu.memory_space<vmem>>, %arg2: memref<24x43xf32, #tpu.memory_space<vmem>>, %arg3: memref<24x1xf32, #tpu.memory_space<vmem>>, %arg4: memref<12x24xf32, #tpu.memory_space<vmem>>, %arg5: memref<12x1xf32, #tpu.memory_space<vmem>>, %arg6: memref<12x1xf32, #tpu.memory_space<vmem>>, %arg7: memref<1x1xf32, #tpu.memory_space<vmem>>, %arg8: memref<1x128xf32, #tpu.memory_space<vmem>>) attributes {dimension_semantics = [#tpu.dimension_semantics<parallel>], iteration_bounds = array<i64: 1>, scalar_prefetch = 0 : i64, scratch_operands = 0 : i64, tpu.core_type = #tpu.core_type<tc>, window_params = [{transform_indices = @transform_0, window_bounds = array<i64: 43, 128>}, {pipeline_mode = #tpu.pipeline_mode<synchronous>, transform_indices = @transform_1, window_bounds = array<i64: 24, 43>}, {pipeline_mode = #tpu.pipeline_mode<synchronous>, transform_indices = @transform_2, window_bounds = array<i64: 24, 1>}, {pipeline_mode = #tpu.pipeline_mode<synchronous>, transform_indices = @transform_3, window_bounds = array<i64: 12, 24>}, {pipeline_mode = #tpu.pipeline_mode<synchronous>, transform_indices = @transform_4, window_bounds = array<i64: 12, 1>}, {pipeline_mode = #tpu.pipeline_mode<synchronous>, transform_indices = @transform_5, window_bounds = array<i64: 12, 1>}, {pipeline_mode = #tpu.pipeline_mode<synchronous>, transform_indices = @transform_6, window_bounds = array<i64: 1, 1>}, {transform_indices = @transform_7, window_bounds = array<i64: 1, 128>}]} {
    %c0 = arith.constant 0 : index
    %c0_0 = arith.constant 0 : index
    %0 = vector.load %arg1[%c0, %c0_0] : memref<43x128xf32, #tpu.memory_space<vmem>>, vector<43x128xf32>
    %c0_1 = arith.constant 0 : index
    %c0_2 = arith.constant 0 : index
    %1 = vector.load %arg2[%c0_1, %c0_2] : memref<24x43xf32, #tpu.memory_space<vmem>>, vector<24x43xf32>
    %cst = arith.constant dense<0.000000e+00> : vector<24x128xf32>
    %2 = tpu.matmul %1, %0, %cst {dimension_numbers = #tpu.dot_dimension_numbers<[1], [0], [0], [1], [0, 0, 1, 1], [], []>} : vector<24x43xf32>, vector<43x128xf32>, vector<24x128xf32> -> vector<24x128xf32>
    %c0_3 = arith.constant 0 : index
    %c0_4 = arith.constant 0 : index
    %3 = vector.load %arg3[%c0_3, %c0_4] : memref<24x1xf32, #tpu.memory_space<vmem>>, vector<24x1xf32>
    %4 = vector.broadcast %3 : vector<24x1xf32> to vector<24x128xf32>
    %5 = arith.addf %2, %4 : vector<24x128xf32>
    %cst_5 = arith.constant 0.000000e+00 : f32
    %6 = vector.broadcast %cst_5 : f32 to vector<24x128xf32>
    %7 = arith.maximumf %5, %6 : vector<24x128xf32>
    %c0_6 = arith.constant 0 : index
    %c0_7 = arith.constant 0 : index
    %8 = vector.load %arg4[%c0_6, %c0_7] : memref<12x24xf32, #tpu.memory_space<vmem>>, vector<12x24xf32>
    %cst_8 = arith.constant dense<0.000000e+00> : vector<12x128xf32>
    %9 = tpu.matmul %8, %7, %cst_8 {dimension_numbers = #tpu.dot_dimension_numbers<[1], [0], [0], [1], [0, 0, 1, 1], [], []>} : vector<12x24xf32>, vector<24x128xf32>, vector<12x128xf32> -> vector<12x128xf32>
    %c0_9 = arith.constant 0 : index
    %c0_10 = arith.constant 0 : index
    %10 = vector.load %arg5[%c0_9, %c0_10] : memref<12x1xf32, #tpu.memory_space<vmem>>, vector<12x1xf32>
    %11 = vector.broadcast %10 : vector<12x1xf32> to vector<12x128xf32>
    %12 = arith.addf %9, %11 : vector<12x128xf32>
    %cst_11 = arith.constant 0.000000e+00 : f32
    %13 = vector.broadcast %cst_11 : f32 to vector<12x128xf32>
    %14 = arith.maximumf %12, %13 : vector<12x128xf32>
    %c0_12 = arith.constant 0 : index
    %c0_13 = arith.constant 0 : index
    %15 = vector.load %arg6[%c0_12, %c0_13] : memref<12x1xf32, #tpu.memory_space<vmem>>, vector<12x1xf32>
    %16 = vector.broadcast %15 : vector<12x1xf32> to vector<12x128xf32>
    %17 = arith.mulf %14, %16 : vector<12x128xf32>
    %cst_14 = arith.constant dense<0.000000e+00> : vector<128xf32>
    %18 = vector.multi_reduction <add>, %17, %cst_14 [0] : vector<12x128xf32> to vector<128xf32>
    %19 = vector.shape_cast %18 : vector<128xf32> to vector<1x128xf32>
    %c0_15 = arith.constant 0 : index
    %c0_16 = arith.constant 0 : index
    %20 = vector.load %arg7[%c0_15, %c0_16] : memref<1x1xf32, #tpu.memory_space<vmem>>, vector<1x1xf32>
    %21 = vector.broadcast %20 : vector<1x1xf32> to vector<1x128xf32>
    %22 = arith.addf %19, %21 : vector<1x128xf32>
    %cst_17 = arith.constant 0.000000e+00 : f32
    %23 = vector.broadcast %cst_17 : f32 to vector<1x128xf32>
    %24 = arith.maximumf %22, %23 : vector<1x128xf32>
    %c0_18 = arith.constant 0 : index
    %c0_19 = arith.constant 0 : index
    %25 = vector.load %arg8[%c0_18, %c0_19] : memref<1x128xf32, #tpu.memory_space<vmem>>, vector<1x128xf32>
    tpu.vector_store %arg8[%c0_18, %c0_19], %24 {strides = array<i32>} : memref<1x128xf32, #tpu.memory_space<vmem>>, vector<1x128xf32>,
    return
  }
  func.func @transform_0(%arg0: i32) -> (i32, i32) {
    %c0_i32 = arith.constant 0 : i32
    %c0_i32_0 = arith.constant 0 : i32
    return %c0_i32, %arg0 : i32, i32
  }
  func.func @transform_1(%arg0: i32) -> (i32, i32) {
    %c0_i32 = arith.constant 0 : i32
    %c0_i32_0 = arith.constant 0 : i32
    %c0_i32_1 = arith.constant 0 : i32
    return %c0_i32, %c0_i32_0 : i32, i32
  }
  func.func @transform_2(%arg0: i32) -> (i32, i32) {
    %c0_i32 = arith.constant 0 : i32
    %c0_i32_0 = arith.constant 0 : i32
    %c0_i32_1 = arith.constant 0 : i32
    return %c0_i32, %c0_i32_0 : i32, i32
  }
  func.func @transform_3(%arg0: i32) -> (i32, i32) {
    %c0_i32 = arith.constant 0 : i32
    %c0_i32_0 = arith.constant 0 : i32
    %c0_i32_1 = arith.constant 0 : i32
    return %c0_i32, %c0_i32_0 : i32, i32
  }
  func.func @transform_4(%arg0: i32) -> (i32, i32) {
    %c0_i32 = arith.constant 0 : i32
    %c0_i32_0 = arith.constant 0 : i32
    %c0_i32_1 = arith.constant 0 : i32
    return %c0_i32, %c0_i32_0 : i32, i32
  }
  func.func @transform_5(%arg0: i32) -> (i32, i32) {
    %c0_i32 = arith.constant 0 : i32
    %c0_i32_0 = arith.constant 0 : i32
    %c0_i32_1 = arith.constant 0 : i32
    return %c0_i32, %c0_i32_0 : i32, i32
  }
  func.func @transform_6(%arg0: i32) -> (i32, i32) {
    %c0_i32 = arith.constant 0 : i32
    %c0_i32_0 = arith.constant 0 : i32
    %c0_i32_1 = arith.constant 0 : i32
    return %c0_i32, %c0_i32_0 : i32, i32
  }
  func.func @transform_7(%arg0: i32) -> (i32, i32) {
    %c0_i32 = arith.constant 0 : i32
    %c0_i32_0 = arith.constant 0 : i32
    return %c0_i32, %arg0 : i32, i32
  }
}

</mosaic_0001>

<llo_original>
// kernel: evaluator_forward.1
$region0: #{evaluator_forward.1}
  #allocation0 [shape = 'u32[]', space=smem, size = 0x4, offset = 0x4, fixed_abs, tag = 'smem constant byte address 0x4 - core index']
  #allocation1 [shape = 'u32[72,128]{1,0:T(1,128)}', space=vmem, size = 0x9000, scoped, tag = 'internal scratch']
  #allocation2 [shape = 'f32[1,1]{1,0:T(1,128)S(1)}', space=vmem, size = 0x200, scoped, tag = 'scoped memory for evaluator_forward.1']
  %s0 = inlined_call_operand.vmem [shape: f32[43,128], index: 0, kind: input, shape index: {}]
  %s1 = inlined_call_operand.vmem [shape: f32[24,43], index: 1, kind: input, shape index: {}]
  %s2 = inlined_call_operand.vmem [shape: f32[24,1], index: 2, kind: input, shape index: {}]
  %s3 = inlined_call_operand.vmem [shape: f32[12,24], index: 3, kind: input, shape index: {}]
  %s4 = inlined_call_operand.vmem [shape: f32[12,1], index: 4, kind: input, shape index: {}]
  %s5 = inlined_call_operand.vmem [shape: f32[12,1], index: 5, kind: input, shape index: {}]
  %s6 = inlined_call_operand.<no memory space> [shape: f32[1,1], index: 6, kind: input, shape index: {}]
  %s7 = inlined_call_operand.vmem [shape: f32[1,128], index: 7, kind: output, shape index: {}]
  %s8 = sld [smem:[#allocation0]]
  $region38: #{evaluator_forward.1} parent=0
    _
  %s10 = ssub.s32 1, %s8
  %s11 = scalar_select 0, %s10, %s8
  %v12 = vstv %s6
  %13 = vst [vmem:[#allocation2] sm:$0x1] %v12
  // Predicated region
  $region2: #{evaluator_forward.1} parent=0 // pred_check
    _
  $region3: #{evaluator_forward.1} parent=0 // pred_check_branch
    %15 = sbr.rel (0) target = $region5
  $region4: #{evaluator_forward.1} parent=0 // pred_region
    _
  $region5: #{evaluator_forward.1} parent=0 // pred_fallthru
    _
  // Predicated region
  $region6: #{evaluator_forward.1} parent=0 // pred_check
    _
  $region7: #{evaluator_forward.1} parent=0 // pred_check_branch
    %17 = sbr.rel (0) target = $region9
  $region8: #{evaluator_forward.1} parent=0 // pred_region
    _
  $region9: #{evaluator_forward.1} parent=0 // pred_fallthru
    _
  // Predicated region
  $region10: #{evaluator_forward.1} parent=0 // pred_check
    _
  $region11: #{evaluator_forward.1} parent=0 // pred_check_branch
    %19 = sbr.rel (0) target = $region13
  $region12: #{evaluator_forward.1} parent=0 // pred_region
    _
  $region13: #{evaluator_forward.1} parent=0 // pred_fallthru
    _
  // Predicated region
  $region14: #{evaluator_forward.1} parent=0 // pred_check
    _
  $region15: #{evaluator_forward.1} parent=0 // pred_check_branch
    %21 = sbr.rel (0) target = $region17
  $region16: #{evaluator_forward.1} parent=0 // pred_region
    _
  $region17: #{evaluator_forward.1} parent=0 // pred_fallthru
    _
  // Predicated region
  $region18: #{evaluator_forward.1} parent=0 // pred_check
    _
  $region19: #{evaluator_forward.1} parent=0 // pred_check_branch
    %23 = sbr.rel (0) target = $region21
  $region20: #{evaluator_forward.1} parent=0 // pred_region
    _
  $region21: #{evaluator_forward.1} parent=0 // pred_fallthru
    _
  // Predicated region
  $region22: #{evaluator_forward.1} parent=0 // pred_check
    _
  $region23: #{evaluator_forward.1} parent=0 // pred_check_branch
    %25 = sbr.rel (0) target = $region25
  $region24: #{evaluator_forward.1} parent=0 // pred_region
    _
  $region25: #{evaluator_forward.1} parent=0 // pred_fallthru
    _
  // Predicated region
  $region26: #{evaluator_forward.1} parent=0 // pred_check
    _
  $region27: #{evaluator_forward.1} parent=0 // pred_check_branch
    %27 = sbr.rel (0) target = $region29
  $region28: #{evaluator_forward.1} parent=0 // pred_region
    _
  $region29: #{evaluator_forward.1} parent=0 // pred_fallthru
    _
  %v28 = vld [vmem:[%s0] sm:$0xff]
  %v29 = vld [vmem:[%s0 + $0x8] sm:$0xff]
  %v30 = vld [vmem:[%s0 + $0x10] sm:$0xff]
  %v31 = vld [vmem:[%s0 + $0x18] sm:$0xff]
  %v32 = vld [vmem:[%s0 + $0x20] sm:$0xff]
  %v33 = vld [vmem:[%s0 + $0x28] sm:$0x7]
  %v34 = vld [vmem:[%s1] sm:$0xff]
  %v35 = vld [vmem:[%s1 + $0x8] sm:$0xff]
  %v36 = vld [vmem:[%s1 + $0x10] sm:$0xff]
  %v37 = vld [vmem:[%s2] sm:$0xff]
  %v38 = vld [vmem:[%s2 + $0x8] sm:$0xff]
  %v39 = vld [vmem:[%s2 + $0x10] sm:$0xff]
  %41 = vset.pattern.permute.xlu0 0
  %42 = vperm.xlu0 %41, %v37
  %v43 = vpop.permute.xlu0 %42
  %46 = vset.pattern.permute.xlu0 0
  %47 = vperm.xlu0 %46, %v38
  %v48 = vpop.permute.xlu0 %47
  %51 = vset.pattern.permute.xlu0 0
  %52 = vperm.xlu0 %51, %v39
  %v53 = vpop.permute.xlu0 %52
  %vm55 = vcmask 351232
  %v57 = vsel %vm55, %v34, 0
  %v60 = vsel %vm55, %v35, 0
  %v63 = vsel %vm55, %v36, 0
  %vm65 = vcmask 1042432
  %v67 = vsel %vm65, %v33, 0
  %69 = vmatpush.msra.mxu0 0.0
  %70 = vmatpush.msra.mxu0 0.0
  %71 = vmatpush.msra.mxu0 0.0
  %72 = vmatpush.msra.mxu0 0.0
  %73 = vmatpush.msra.mxu0 0.0
  %74 = vmatpush.msra.mxu0 0.0
  %75 = vmatpush.msra.mxu0 0.0
  %76 = vmatpush.msra.mxu0 0.0
  %77 = vmatpush.msra.mxu0 0.0
  %78 = vmatpush.msra.mxu0 0.0
  %79 = vmatpush.msra.mxu0 %v67
  %80 = vmatpush.msra.mxu0 %v32
  %81 = vmatpush.msra.mxu0 %v31
  %82 = vmatpush.msra.mxu0 %v30
  %83 = vmatpush.msra.mxu0 %v29
  %84 = vmatpush.msra.mxu0 %v28
  %85 = vmatmul.f32.gmra.mxu0 %v57
  %v86 = vpop.f32.mrf.mxu0
  %v87 = vadd.f32 %v43, %v86
  %88 = vmatmul.f32.gmra.mxu0 %v60
  %v89 = vpop.f32.mrf.mxu0
  %v90 = vadd.f32 %v48, %v89
  %91 = vmatmul.f32.gmra.mxu0 %v63
  %v92 = vpop.f32.mrf.mxu0
  %v93 = vadd.f32 %v53, %v92
  %94 = vdwg.mxu0
  %v95 = vmax.f32 %v87, 0.0
  %v96 = vmax.f32 %v90, 0.0
  %v97 = vmax.f32 %v93, 0.0
  %v98 = vld [vmem:[%s3] sm:$0xff]
  %v99 = vld [vmem:[%s3 + $0x8] sm:$0xf]
  %v100 = vld [vmem:[%s4] sm:$0xff]
  %v101 = vld [vmem:[%s4 + $0x8] sm:$0xf]
  %103 = vset.pattern.permute.xlu0 0
  %104 = vperm.xlu0 %103, %v100
  %v105 = vpop.permute.xlu0 %104
  %108 = vset.pattern.permute.xlu0 0
  %109 = vperm.xlu0 %108, %v101
  %v110 = vpop.permute.xlu0 %109
  %vm112 = vcmask 195584
  %v114 = vsel %vm112, %v98, 0
  %v117 = vsel %vm112, %v99, 0
  %119 = vmatpush.msra.mxu0 0.0
  %120 = vmatpush.msra.mxu0 0.0
  %121 = vmatpush.msra.mxu0 0.0
  %122 = vmatpush.msra.mxu0 0.0
  %123 = vmatpush.msra.mxu0 0.0
  %124 = vmatpush.msra.mxu0 0.0
  %125 = vmatpush.msra.mxu0 0.0
  %126 = vmatpush.msra.mxu0 0.0
  %127 = vmatpush.msra.mxu0 0.0
  %128 = vmatpush.msra.mxu0 0.0
  %129 = vmatpush.msra.mxu0 0.0
  %130 = vmatpush.msra.mxu0 0.0
  %131 = vmatpush.msra.mxu0 0.0
  %132 = vmatpush.msra.mxu0 %v97
  %133 = vmatpush.msra.mxu0 %v96
  %134 = vmatpush.msra.mxu0 %v95
  %135 = vmatmul.f32.gmra.mxu0 %v114
  %v136 = vpop.f32.mrf.mxu0
  %v137 = vadd.f32 %v105, %v136
  %138 = vmatmul.f32.gmra.mxu0 %v117
  %v139 = vpop.f32.mrf.mxu0
  %v140 = vadd.f32 %v110, %v139
  %141 = vdwg.mxu0
  %v142 = vmax.f32 %v137, 0.0
  %v143 = vmax.f32 %v140, 0.0
  %v144 = vld [vmem:[%s5] sm:$0xff]
  %v145 = vld [vmem:[%s5 + $0x8] sm:$0xf]
  %147 = vset.pattern.permute.xlu0 0
  %148 = vperm.xlu0 %147, %v144
  %v149 = vpop.permute.xlu0 %148
  %152 = vset.pattern.permute.xlu0 0
  %153 = vperm.xlu0 %152, %v145
  %v154 = vpop.permute.xlu0 %153
  %v156 = vmul.f32 %v142, %v149
  %v157 = vmul.f32 %v143, %v154
  %vm158 = vcmask 1043456
  %v159 = vsel %vm158, %v157, 0.0
  %v160 = vadd.f32 %v156, %v159
  %v161 = vrot.slane %v160, 4
  %v162 = vadd.f32 %v160, %v161
  %v163 = vrot.slane %v162, 2
  %v164 = vadd.f32 %v162, %v163
  %v165 = vrot.slane %v164, 1
  %v166 = vadd.f32 %v164, %v165
  %v167 = vld [vmem:[#allocation2] sm:$0x1]
  %169 = vset.pattern.permute.xlu0 0
  %170 = vperm.xlu0 %169, %v167
  %v171 = vpop.permute.xlu0 %170
  %v173 = vperm.slane %v171, 0
  %v174 = vadd.f32 %v166, %v173
  %v175 = vmax.f32 %v174, 0.0
  %176 = vst [vmem:[%s7] sm:$0x1] %v175
  // Predicated region
  $region30: #{evaluator_forward.1} parent=0 // pred_check
    _
  $region31: #{evaluator_forward.1} parent=0 // pred_check_branch
    %178 = sbr.rel (0) target = $region33
  $region32: #{evaluator_forward.1} parent=0 // pred_region
    _
  $region33: #{evaluator_forward.1} parent=0 // pred_fallthru
    _
  // Predicated region
  $region34: #{evaluator_forward.1} parent=0 // pred_check
    _
  $region35: #{evaluator_forward.1} parent=0 // pred_check_branch
    %180 = sbr.rel (0) target = $region37
  $region36: #{evaluator_forward.1} parent=0 // pred_region
    _
  $region37: #{evaluator_forward.1} parent=0 // pred_fallthru
    _

</llo_original>
